<compile_context>
chip_gen: v7x
topology: tpu7x:2x2x1
jax: 0.10.0
libtpu: 0.0.40
codegen_flags: <defaults>
</compile_context>

<pallas_src>
import jax
import jax.numpy as jnp
from jax import lax
from jax.experimental import pallas as pl
from jax.experimental.pallas import tpu as pltpu


def _round_up(n, m):
    return ((n + m - 1) // m) * m


def _largest_divisor_leq(n, cap):
    for d in range(min(n, cap), 0, -1):
        if n % d == 0:
            return d
    return 1


def _pick_batch_block(bp, cap=256):
    """Largest multiple-of-8 divisor of bp that is <= cap (bp is a multiple of 8)."""
    if bp <= cap:
        return bp
    best = 8
    d = 8
    while d <= cap:
        if bp % d == 0:
            best = d
        d += 8
    return best


# ---------------------------------------------------------------------------
# Row-tiled matmul + bias kernel: hoisted input projection (T*Bp, D) @ (D, 4Hp).
# bf16 operands on the MXU, f32 accumulation, output dtype selectable.
# ---------------------------------------------------------------------------
def _matmul_bias_kernel(a_ref, w_ref, b_ref, o_ref):
    acc = jnp.dot(a_ref[...], w_ref[...], preferred_element_type=jnp.float32)
    o_ref[...] = (acc + b_ref[...]).astype(o_ref.dtype)


def _matmul_bias(a_bf16, w_bf16, bias_f32, *, out_dtype, row_block):
    m, k = a_bf16.shape
    n = w_bf16.shape[1]
    return pl.pallas_call(
        _matmul_bias_kernel,
        out_shape=jax.ShapeDtypeStruct((m, n), out_dtype),
        grid_spec=pltpu.PrefetchScalarGridSpec(
            num_scalar_prefetch=0,
            grid=(m // row_block,),
            in_specs=[
                pl.BlockSpec((row_block, k), lambda i: (i, 0)),   # activation row tile
                pl.BlockSpec((k, n), lambda i: (0, 0)),           # weight (invariant)
                pl.BlockSpec((1, n), lambda i: (0, 0)),           # bias (invariant)
            ],
            out_specs=pl.BlockSpec((row_block, n), lambda i: (i, 0)),
        ),
        compiler_params=pltpu.CompilerParams(
            dimension_semantics=("parallel",),
            vmem_limit_bytes=32 * 1024 * 1024,
        ),
    )(a_bf16, w_bf16, bias_f32)


# ---------------------------------------------------------------------------
# Recurrent kernel with fused FC head.
# Consumes time-major pre_gates (T, Bp, 4*Hp) bf16, W_hh^T, W_fc^T, b_fc.
# Processes TT time steps per grid iteration; h/c persist in VMEM scratch.
# On the final time block the logits (Bp, Cp) are computed and stored lane-dense.
# ---------------------------------------------------------------------------
def _lstm_recurrent_fc_kernel(pg_ref, whh_ref, wfc_ref, bfc_ref, logits_ref,
                              h_scr, c_scr):
    t_blk = pl.program_id(1)

    @pl.when(t_blk == 0)
    def _():
        h_scr[...] = jnp.zeros_like(h_scr)
        c_scr[...] = jnp.zeros_like(c_scr)

    hp = h_scr.shape[-1]          # padded hidden width (multiple of 128)
    tt_steps = pg_ref.shape[0]    # time steps in this block

    def step(tt, carry):
        h, c = carry
        # Single MXU push per step; x-projection + bias were precomputed.
        gates = pg_ref[tt].astype(jnp.float32) + jnp.dot(
            h.astype(jnp.bfloat16), whh_ref[...],
            preferred_element_type=jnp.float32)
        # PyTorch gate order (i, f, g, o); each slice is a 128-lane-aligned slab.
        i_g = jax.nn.sigmoid(gates[:, 0 * hp:1 * hp])
        f_g = jax.nn.sigmoid(gates[:, 1 * hp:2 * hp])
        g_g = jnp.tanh(gates[:, 2 * hp:3 * hp])
        o_g = jax.nn.sigmoid(gates[:, 3 * hp:4 * hp])
        c = f_g * c + i_g * g_g
        h = o_g * jnp.tanh(c)
        return h, c

    h, c = lax.fori_loop(0, tt_steps, step, (h_scr[...], c_scr[...]), unroll=True)
    h_scr[...] = h
    c_scr[...] = c

    @pl.when(t_blk == pl.num_programs(1) - 1)
    def _():
        # Eval-mode dropout == identity; FC head fused here (no h_T HBM round trip).
        logits = jnp.dot(h.astype(jnp.bfloat16), wfc_ref[...],
                         preferred_element_type=jnp.float32) + bfc_ref[...]
        logits_ref[...] = logits.astype(logits_ref.dtype)


# ---------------------------------------------------------------------------
# Weight / bias layout prep (one-time plumbing, done in XLA on the host side).
# ---------------------------------------------------------------------------
def _pad_gate_weight_t(w, H, Hp, in_rows):
    """(4H, in_dim) PyTorch gate-stacked weight -> (in_rows, 4*Hp) transposed,
    zero-padded; each gate (i, f, g, o) occupies its own 128-aligned Hp-wide slab."""
    in_dim = w.shape[1]
    out = jnp.zeros((in_rows, 4 * Hp), jnp.float32)
    for k in range(4):
        out = out.at[:in_dim, k * Hp:k * Hp + H].set(w[k * H:(k + 1) * H, :].T)
    return out.astype(jnp.bfloat16)


def _pad_gate_bias(b, H, Hp):
    out = jnp.zeros((1, 4 * Hp), jnp.float32)
    for k in range(4):
        out = out.at[0, k * Hp:k * Hp + H].set(b[k * H:(k + 1) * H])
    return out


def lstm_classifier_forward(x_btd, params, *, time_block=32):
    """x_btd: (B, T, D) float32 (PyTorch batch_first layout). Returns (B, C) logits."""
    B, T, D = x_btd.shape
    H = params["w_hh"].shape[1]          # w_hh: (4H, H)
    C = params["w_fc"].shape[0]          # w_fc: (C, H)

    Bp = _round_up(B, 8)                 # sublane-aligned batch
    Hp = _round_up(H, 128)               # lane-aligned hidden -> gate slices on vreg bounds
    Cp = _round_up(C, 128)               # lane-dense FC output
    TT = _largest_divisor_leq(T, time_block)   # time steps per grid iteration
    TB = _pick_batch_block(Bp)           # batch block ("parallel" axis -> both v7x TCs)

    # ---- weight prep ----
    w_ih_t = _pad_gate_weight_t(params["w_ih"], H, Hp, D)     # (D, 4Hp)  bf16
    w_hh_t = _pad_gate_weight_t(params["w_hh"], H, Hp, Hp)    # (Hp, 4Hp) bf16
    bias = _pad_gate_bias(params["b_ih"] + params["b_hh"], H, Hp)   # (1, 4Hp) f32
    w_fc_t = (jnp.zeros((Hp, Cp), jnp.float32)
              .at[:H, :C].set(params["w_fc"].T).astype(jnp.bfloat16))
    b_fc = jnp.zeros((1, Cp), jnp.float32).at[0, :C].set(params["b_fc"])

    # time-major, batch-padded, bf16 input (T, Bp, D)
    x_tbd = jnp.pad(jnp.transpose(x_btd, (1, 0, 2)),
                    ((0, 0), (0, Bp - B), (0, 0))).astype(jnp.bfloat16)

    # ---- 1) hoisted input projection: row-tiled MXU matmul (bias folded in) ----
    # pre_gates stored bf16 (halves HBM traffic of the largest intermediate);
    # gate math in the recurrence still happens in f32.
    row_block = Bp * _largest_divisor_leq(T, max(1, 512 // Bp))
    pre_gates = _matmul_bias(x_tbd.reshape(T * Bp, D), w_ih_t, bias,
                             out_dtype=jnp.bfloat16, row_block=row_block)
    pre_gates = pre_gates.reshape(T, Bp, 4 * Hp)              # (T, Bp, 4Hp) bf16

    # ---- 2) recurrence (h @ W_hh^T + pre_gates[t]) with fused FC head ----
    logits_p = pl.pallas_call(
        _lstm_recurrent_fc_kernel,
        out_shape=jax.ShapeDtypeStruct((Bp, Cp), jnp.float32),
        grid_spec=pltpu.PrefetchScalarGridSpec(
            num_scalar_prefetch=0,
            grid=(Bp // TB, T // TT),
            in_specs=[
                pl.BlockSpec((TT, TB, 4 * Hp), lambda b, t: (t, b, 0)),   # pre_gates tile
                pl.BlockSpec((Hp, 4 * Hp), lambda b, t: (0, 0)),          # W_hh^T (invariant)
                pl.BlockSpec((Hp, Cp), lambda b, t: (0, 0)),              # W_fc^T (invariant)
                pl.BlockSpec((1, Cp), lambda b, t: (0, 0)),               # b_fc   (invariant)
            ],
            out_specs=pl.BlockSpec((TB, Cp), lambda b, t: (b, 0)),        # resident logits
            scratch_shapes=[
                pltpu.VMEM((TB, Hp), jnp.float32),   # h state
                pltpu.VMEM((TB, Hp), jnp.float32),   # c state
            ],
        ),
        compiler_params=pltpu.CompilerParams(
            dimension_semantics=("parallel", "arbitrary"),   # batch parallel, time sequential
            vmem_limit_bytes=32 * 1024 * 1024,
        ),
    )(pre_gates, w_hh_t, w_fc_t, b_fc)

    return logits_p[:B, :C]


def reference_forward(x_btd, params):
    """Pure-JAX f32 reference matching PyTorch LSTM semantics (eval mode)."""
    B, T, D = x_btd.shape
    H = params["w_hh"].shape[1]
    h = jnp.zeros((B, H), jnp.float32)
    c = jnp.zeros((B, H), jnp.float32)
    bias = params["b_ih"] + params["b_hh"]
    for t in range(T):
        gates = x_btd[:, t, :] @ params["w_ih"].T + h @ params["w_hh"].T + bias
        i = jax.nn.sigmoid(gates[:, 0 * H:1 * H])
        f = jax.nn.sigmoid(gates[:, 1 * H:2 * H])
        g = jnp.tanh(gates[:, 2 * H:3 * H])
        o = jax.nn.sigmoid(gates[:, 3 * H:4 * H])
        c = f * c + i * g
        h = o * jnp.tanh(c)
    return h @ params["w_fc"].T + params["b_fc"]


def init_params(key, input_dim, hidden_dim, num_classes):
    ks = jax.random.split(key, 6)
    scale = 0.1
    return {
        "w_ih": scale * jax.random.normal(ks[0], (4 * hidden_dim, input_dim), jnp.float32),
        "w_hh": scale * jax.random.normal(ks[1], (4 * hidden_dim, hidden_dim), jnp.float32),
        "b_ih": scale * jax.random.normal(ks[2], (4 * hidden_dim,), jnp.float32),
        "b_hh": scale * jax.random.normal(ks[3], (4 * hidden_dim,), jnp.float32),
        "w_fc": scale * jax.random.normal(ks[4], (num_classes, hidden_dim), jnp.float32),
        "b_fc": scale * jax.random.normal(ks[5], (num_classes,), jnp.float32),
    }


if __name__ == "__main__":
    B, T, D, H, C = 2, 8, 16, 32, 2     # batch, seq, input_dim, hidden_dim, num_classes

    key = jax.random.PRNGKey(0)
    k_x, k_p = jax.random.split(key)
    x = jax.random.normal(k_x, (B, T, D), jnp.float32)   # batch_first, like PyTorch
    params = init_params(k_p, D, H, C)

    out = lstm_classifier_forward(x, params)
    out = jax.block_until_ready(out)

    ref = reference_forward(x, params)
    assert out.shape == (B, C)
    # bf16 MXU operands / bf16 pre_gates -> looser tolerance than the f32 reference.
    assert jnp.allclose(out, ref, rtol=2e-2, atol=2e-2), (
        f"kernel/reference mismatch: max abs err = {jnp.max(jnp.abs(out - ref))}")

    print("KERNEL_OK")
</pallas_src>

<mosaic_0001>
module attributes {stable_mosaic.version = 11 : i64} {
  func.func @_matmul_bias_kernel(%arg0: i32, %arg1: memref<64x16xbf16, #tpu.memory_space<vmem>>, %arg2: memref<16x512xbf16, #tpu.memory_space<vmem>>, %arg3: memref<1x512xf32, #tpu.memory_space<vmem>>, %arg4: memref<64x512xbf16, #tpu.memory_space<vmem>>) attributes {dimension_semantics = [#tpu.dimension_semantics<parallel>], iteration_bounds = array<i64: 1>, scalar_prefetch = 0 : i64, scratch_operands = 0 : i64, tpu.core_type = #tpu.core_type<tc>, window_params = [{transform_indices = @transform_0, window_bounds = array<i64: 64, 16>}, {pipeline_mode = #tpu.pipeline_mode<synchronous>, transform_indices = @transform_1, window_bounds = array<i64: 16, 512>}, {pipeline_mode = #tpu.pipeline_mode<synchronous>, transform_indices = @transform_2, window_bounds = array<i64: 1, 512>}, {transform_indices = @transform_3, window_bounds = array<i64: 64, 512>}]} {
    %c0 = arith.constant 0 : index
    %c0_0 = arith.constant 0 : index
    %0 = vector.load %arg1[%c0, %c0_0] : memref<64x16xbf16, #tpu.memory_space<vmem>>, vector<64x16xbf16>
    %c0_1 = arith.constant 0 : index
    %c0_2 = arith.constant 0 : index
    %1 = vector.load %arg2[%c0_1, %c0_2] : memref<16x512xbf16, #tpu.memory_space<vmem>>, vector<16x512xbf16>
    %cst = arith.constant dense<0.000000e+00> : vector<64x512xf32>
    %2 = tpu.matmul %0, %1, %cst {dimension_numbers = #tpu.dot_dimension_numbers<[1], [0], [0], [1], [0, 0, 1, 1], [], []>} : vector<64x16xbf16>, vector<16x512xbf16>, vector<64x512xf32> -> vector<64x512xf32>
    %c0_3 = arith.constant 0 : index
    %c0_4 = arith.constant 0 : index
    %3 = vector.load %arg3[%c0_3, %c0_4] : memref<1x512xf32, #tpu.memory_space<vmem>>, vector<1x512xf32>
    %4 = vector.broadcast %3 : vector<1x512xf32> to vector<64x512xf32>
    %5 = arith.addf %2, %4 : vector<64x512xf32>
    %6 = arith.truncf %5 : vector<64x512xf32> to vector<64x512xbf16>
    %c0_5 = arith.constant 0 : index
    %c0_6 = arith.constant 0 : index
    %7 = vector.load %arg4[%c0_5, %c0_6] : memref<64x512xbf16, #tpu.memory_space<vmem>>, vector<64x512xbf16>
    tpu.vector_store %arg4[%c0_5, %c0_6], %6 {strides = array<i32>} : memref<64x512xbf16, #tpu.memory_space<vmem>>, vector<64x512xbf16>,
    return
  }
  func.func @transform_0(%arg0: i32) -> (i32, i32) {
    %c0_i32 = arith.constant 0 : i32
    %c0_i32_0 = arith.constant 0 : i32
    return %arg0, %c0_i32 : i32, i32
  }
  func.func @transform_1(%arg0: i32) -> (i32, i32) {
    %c0_i32 = arith.constant 0 : i32
    %c0_i32_0 = arith.constant 0 : i32
    %c0_i32_1 = arith.constant 0 : i32
    return %c0_i32, %c0_i32_0 : i32, i32
  }
  func.func @transform_2(%arg0: i32) -> (i32, i32) {
    %c0_i32 = arith.constant 0 : i32
    %c0_i32_0 = arith.constant 0 : i32
    %c0_i32_1 = arith.constant 0 : i32
    return %c0_i32, %c0_i32_0 : i32, i32
  }
  func.func @transform_3(%arg0: i32) -> (i32, i32) {
    %c0_i32 = arith.constant 0 : i32
    %c0_i32_0 = arith.constant 0 : i32
    return %arg0, %c0_i32 : i32, i32
  }
}

</mosaic_0001>

<llo_original>
// kernel: tpu_custom_call.1
$region0: #{tpu_custom_call.1}
  #allocation0 [shape = 'u32[]', space=smem, size = 0x4, offset = 0x4, fixed_abs, tag = 'smem constant byte address 0x4 - core index']
  #allocation1 [shape = 'u32[144,128]{1,0:T(1,128)}', space=vmem, size = 0x12000, scoped, tag = 'internal scratch']
  %s0 = inlined_call_operand.vmem [shape: bf16[64,16], index: 0, kind: input, shape index: {}]
  %s1 = inlined_call_operand.vmem [shape: bf16[16,512], index: 1, kind: input, shape index: {}]
  %s2 = inlined_call_operand.vmem [shape: f32[1,512], index: 2, kind: input, shape index: {}]
  %s3 = inlined_call_operand.hbm [shape: bf16[64,512], index: 3, kind: output, shape index: {}]
  %s4 = sld [smem:[#allocation0]]
  $region22: #{tpu_custom_call.1} parent=0
    _
  %s6 = ssub.s32 1, %s4
  %s7 = scalar_select 0, %s6, %s4
  $region1: #{tpu_custom_call.1} parent=0
    #allocation2 [shape = 'u8[65536]{0}', space=vmem, size = 0x10000, scoped, tag = 'output window, operand 0, single buffered']
    #allocation3 [shape = 's32[1]{0}', space=sflag, size = 0x4, scoped, tag = 'scoped memory for tpu_custom_call.1']
    %8 = vsyncpa [#allocation3], 0
    // Predicated region
    $region2: #{tpu_custom_call.1} parent=1 // pred_check
      _
    $region3: #{tpu_custom_call.1} parent=1 // pred_check_branch
      %10 = sbr.rel (0) target = $region5
    $region4: #{tpu_custom_call.1} parent=1 // pred_region
      _
    $region5: #{tpu_custom_call.1} parent=1 // pred_fallthru
      _
    // Predicated region
    $region6: #{tpu_custom_call.1} parent=1 // pred_check
      _
    $region7: #{tpu_custom_call.1} parent=1 // pred_check_branch
      %12 = sbr.rel (0) target = $region9
    $region8: #{tpu_custom_call.1} parent=1 // pred_region
      _
    $region9: #{tpu_custom_call.1} parent=1 // pred_fallthru
      _
    // Predicated region
    $region10: #{tpu_custom_call.1} parent=1 // pred_check
      _
    $region11: #{tpu_custom_call.1} parent=1 // pred_check_branch
      %14 = sbr.rel (0) target = $region13
    $region12: #{tpu_custom_call.1} parent=1 // pred_region
      _
    $region13: #{tpu_custom_call.1} parent=1 // pred_fallthru
      _
    %v16 = vld [vmem:[%s0] sm:$0xf]
    %v17 = vld [vmem:[%s0 + $0x4] sm:$0xf]
    %v18 = vld [vmem:[%s0 + $0x8] sm:$0xf]
    %v19 = vld [vmem:[%s0 + $0xc] sm:$0xf]
    %v20 = vld [vmem:[%s0 + $0x10] sm:$0xf]
    %v21 = vld [vmem:[%s0 + $0x14] sm:$0xf]
    %v22 = vld [vmem:[%s0 + $0x18] sm:$0xf]
    %v23 = vld [vmem:[%s0 + $0x1c] sm:$0xf]
    %v24 = vld [vmem:[%s1] sm:$0xff]
    %v25 = vld [vmem:[%s1 + $0x8] sm:$0xff]
    %v26 = vld [vmem:[%s1 + $0x10] sm:$0xff]
    %v27 = vld [vmem:[%s1 + $0x18] sm:$0xff]
    %v28 = vld [vmem:[%s2] sm:$0xf]
    %v30 = vlaneseq
    %v31 = vshrl.u32 %v30, 7
    %v32 = vsub.s32 0, %v31
    %v33 = vrot.slane %v28, %v32
    %v34 = vlaneseq
    %v35 = vshrl.u32 %v34, 7
    %v36 = vsub.s32 1, %v35
    %v37 = vrot.slane %v28, %v36
    %v38 = vlaneseq
    %v39 = vshrl.u32 %v38, 7
    %v40 = vsub.s32 2, %v39
    %v41 = vrot.slane %v28, %v40
    %v42 = vlaneseq
    %v43 = vshrl.u32 %v42, 7
    %v44 = vsub.s32 3, %v43
    %v45 = vrot.slane %v28, %v44
    %v58 = vunpack.c.l.b16 %v16
    %v59 = vunpack.c.l.b16 %v17
    %v60 = vunpack.c.l.b16 %v18
    %v61 = vunpack.c.l.b16 %v19
    %v62 = vunpack.c.l.b16 %v20
    %v63 = vunpack.c.l.b16 %v21
    %v64 = vunpack.c.l.b16 %v22
    %v65 = vunpack.c.l.b16 %v23
    %v66 = vpack.c.b16 %v59, %v58
    %v67 = vpack.c.b16 %v61, %v60
    %v68 = vpack.c.b16 %v63, %v62
    %v69 = vpack.c.b16 %v65, %v64
    %v74 = vunpack.c.l.b16 %v24
    %v75 = vunpack.c.h.b16 %v24
    %v76 = vunpack.c.l.b16 %v25
    %v77 = vunpack.c.h.b16 %v25
    %v78 = vunpack.c.l.b16 %v26
    %v79 = vunpack.c.h.b16 %v26
    %v80 = vunpack.c.l.b16 %v27
    %v81 = vunpack.c.h.b16 %v27
    %v82 = vpack.c.b16 %v78, %v74
    %v83 = vpack.c.b16 %v79, %v75
    %v84 = vpack.c.b16 %v80, %v76
    %v85 = vpack.c.b16 %v81, %v77
    %vm90 = vcmask 130048
    %v92 = vsel %vm90, %v66, 0
    %v95 = vsel %vm90, %v67, 0
    %v98 = vsel %vm90, %v68, 0
    %v101 = vsel %vm90, %v69, 0
    %103 = vmatprep.subr.bf16.mxu0 %v83
    %104 = vmatpush1.bf16.msra.mxu0 %v82
    %105 = vmatprep.subr.bf16.mxu0 0
    %106 = vmatpush1.bf16.msra.mxu0 0
    %107 = vmatprep.subr.bf16.mxu0 0
    %108 = vmatpush1.bf16.msra.mxu0 0
    %109 = vmatprep.subr.bf16.mxu0 0
    %110 = vmatpush1.bf16.msra.mxu0 0
    %111 = vmatprep.subr.bf16.mxu0 0
    %112 = vmatpush1.bf16.msra.mxu0 0
    %113 = vmatprep.subr.bf16.mxu0 0
    %114 = vmatpush1.bf16.msra.mxu0 0
    %115 = vmatprep.subr.bf16.mxu0 0
    %116 = vmatpush1.bf16.msra.mxu0 0
    %117 = vmatprep.subr.bf16.mxu0 0
    %118 = vmatpush1.bf16.msra.mxu0 0
    %119 = vmatprep.subr.bf16.mxu0 0
    %120 = vmatpush1.bf16.msra.mxu0 0
    %121 = vmatprep.subr.bf16.mxu0 0
    %122 = vmatpush1.bf16.msra.mxu0 0
    %123 = vmatprep.subr.bf16.mxu0 0
    %124 = vmatpush1.bf16.msra.mxu0 0
    %125 = vmatprep.subr.bf16.mxu0 0
    %126 = vmatpush1.bf16.msra.mxu0 0
    %127 = vmatprep.subr.bf16.mxu0 0
    %128 = vmatpush1.bf16.msra.mxu0 0
    %129 = vmatprep.subr.bf16.mxu0 0
    %130 = vmatpush1.bf16.msra.mxu0 0
    %131 = vmatprep.subr.bf16.mxu0 0
    %132 = vmatpush1.bf16.msra.mxu0 0
    %133 = vmatprep.subr.bf16.mxu0 0
    %134 = vmatpush1.bf16.msra.mxu0 0
    %135 = vmatprep.mubr.bf16.mxu0 0
    %136 = vmatmul.mubr.bf16.gmra.mrb[0].mxu0 %v92
    %v137 = vpop.f32.mrb[0].mxu0
    %v138 = vadd.f32 %v33, %v137
    %v139 = vpop.f32.mrb[0].mxu0
    %v140 = vadd.f32 %v37, %v139
    %v141 = vpop.f32.mrb[0].mxu0
    %v142 = vadd.f32 %v33, %v141
    %v143 = vpop.f32.mrb[0].mxu0
    %v144 = vadd.f32 %v37, %v143
    %145 = vmatprep.mubr.bf16.mxu0 0
    %146 = vmatmul.mubr.bf16.gmra.mrb[0].mxu0 %v95
    %v147 = vpop.f32.mrb[0].mxu0
    %v148 = vadd.f32 %v33, %v147
    %v149 = vpop.f32.mrb[0].mxu0
    %v150 = vadd.f32 %v37, %v149
    %v151 = vpop.f32.mrb[0].mxu0
    %v152 = vadd.f32 %v33, %v151
    %v153 = vpop.f32.mrb[0].mxu0
    %v154 = vadd.f32 %v37, %v153
    %155 = vmatprep.mubr.bf16.mxu0 0
    %156 = vmatmul.mubr.bf16.gmra.mrb[0].mxu0 %v98
    %v157 = vpop.f32.mrb[0].mxu0
    %v158 = vadd.f32 %v33, %v157
    %v159 = vpop.f32.mrb[0].mxu0
    %v160 = vadd.f32 %v37, %v159
    %v161 = vpop.f32.mrb[0].mxu0
    %v162 = vadd.f32 %v33, %v161
    %v163 = vpop.f32.mrb[0].mxu0
    %v164 = vadd.f32 %v37, %v163
    %165 = vmatprep.mubr.bf16.mxu0 0
    %166 = vmatmul.mubr.bf16.gmra.mrb[0].mxu0 %v101
    %v167 = vpop.f32.mrb[0].mxu0
    %v168 = vadd.f32 %v33, %v167
    %v169 = vpop.f32.mrb[0].mxu0
    %v170 = vadd.f32 %v37, %v169
    %v171 = vpop.f32.mrb[0].mxu0
    %v172 = vadd.f32 %v33, %v171
    %v173 = vpop.f32.mrb[0].mxu0
    %v174 = vadd.f32 %v37, %v173
    %175 = vdwg.mxu0
    %176 = vmatprep.subr.bf16.mxu0 %v85
    %177 = vmatpush1.bf16.msra.mxu0 %v84
    %178 = vmatprep.subr.bf16.mxu0 0
    %179 = vmatpush1.bf16.msra.mxu0 0
    %180 = vmatprep.subr.bf16.mxu0 0
    %181 = vmatpush1.bf16.msra.mxu0 0
    %182 = vmatprep.subr.bf16.mxu0 0
    %183 = vmatpush1.bf16.msra.mxu0 0
    %184 = vmatprep.subr.bf16.mxu0 0
    %185 = vmatpush1.bf16.msra.mxu0 0
    %186 = vmatprep.subr.bf16.mxu0 0
    %187 = vmatpush1.bf16.msra.mxu0 0
    %188 = vmatprep.subr.bf16.mxu0 0
    %189 = vmatpush1.bf16.msra.mxu0 0
    %190 = vmatprep.subr.bf16.mxu0 0
    %191 = vmatpush1.bf16.msra.mxu0 0
    %192 = vmatprep.subr.bf16.mxu0 0
    %193 = vmatpush1.bf16.msra.mxu0 0
    %194 = vmatprep.subr.bf16.mxu0 0
    %195 = vmatpush1.bf16.msra.mxu0 0
    %196 = vmatprep.subr.bf16.mxu0 0
    %197 = vmatpush1.bf16.msra.mxu0 0
    %198 = vmatprep.subr.bf16.mxu0 0
    %199 = vmatpush1.bf16.msra.mxu0 0
    %200 = vmatprep.subr.bf16.mxu0 0
    %201 = vmatpush1.bf16.msra.mxu0 0
    %202 = vmatprep.subr.bf16.mxu0 0
    %203 = vmatpush1.bf16.msra.mxu0 0
    %204 = vmatprep.subr.bf16.mxu0 0
    %205 = vmatpush1.bf16.msra.mxu0 0
    %206 = vmatprep.subr.bf16.mxu0 0
    %207 = vmatpush1.bf16.msra.mxu0 0
    %208 = vmatprep.mubr.bf16.mxu0 0
    %209 = vmatmul.mubr.bf16.gmra.mrb[0].mxu0 %v92
    %v210 = vpop.f32.mrb[0].mxu0
    %v211 = vadd.f32 %v41, %v210
    %v212 = vpop.f32.mrb[0].mxu0
    %v213 = vadd.f32 %v45, %v212
    %v214 = vpop.f32.mrb[0].mxu0
    %v215 = vadd.f32 %v41, %v214
    %v216 = vpop.f32.mrb[0].mxu0
    %v217 = vadd.f32 %v45, %v216
    %218 = vmatprep.mubr.bf16.mxu0 0
    %219 = vmatmul.mubr.bf16.gmra.mrb[0].mxu0 %v95
    %v220 = vpop.f32.mrb[0].mxu0
    %v221 = vadd.f32 %v41, %v220
    %v222 = vpop.f32.mrb[0].mxu0
    %v223 = vadd.f32 %v45, %v222
    %v224 = vpop.f32.mrb[0].mxu0
    %v225 = vadd.f32 %v41, %v224
    %v226 = vpop.f32.mrb[0].mxu0
    %v227 = vadd.f32 %v45, %v226
    %228 = vmatprep.mubr.bf16.mxu0 0
    %229 = vmatmul.mubr.bf16.gmra.mrb[0].mxu0 %v98
    %v230 = vpop.f32.mrb[0].mxu0
    %v231 = vadd.f32 %v41, %v230
    %v232 = vpop.f32.mrb[0].mxu0
    %v233 = vadd.f32 %v45, %v232
    %v234 = vpop.f32.mrb[0].mxu0
    %v235 = vadd.f32 %v41, %v234
    %v236 = vpop.f32.mrb[0].mxu0
    %v237 = vadd.f32 %v45, %v236
    %238 = vmatprep.mubr.bf16.mxu0 0
    %239 = vmatmul.mubr.bf16.gmra.mrb[0].mxu0 %v101
    %v240 = vpop.f32.mrb[0].mxu0
    %v241 = vadd.f32 %v41, %v240
    %v242 = vpop.f32.mrb[0].mxu0
    %v243 = vadd.f32 %v45, %v242
    %v244 = vpop.f32.mrb[0].mxu0
    %v245 = vadd.f32 %v41, %v244
    %v246 = vpop.f32.mrb[0].mxu0
    %v247 = vadd.f32 %v45, %v246
    %248 = vdwg.mxu0
    %v249 = vpack.c.bf16 %v142, %v138
    %v250 = vpack.c.bf16 %v144, %v140
    %v251 = vpack.c.bf16 %v215, %v211
    %v252 = vpack.c.bf16 %v217, %v213
    %v253 = vpack.c.bf16 %v152, %v148
    %v254 = vpack.c.bf16 %v154, %v150
    %v255 = vpack.c.bf16 %v225, %v221
    %v256 = vpack.c.bf16 %v227, %v223
    %v257 = vpack.c.bf16 %v162, %v158
    %v258 = vpack.c.bf16 %v164, %v160
    %v259 = vpack.c.bf16 %v235, %v231
    %v260 = vpack.c.bf16 %v237, %v233
    %v261 = vpack.c.bf16 %v172, %v168
    %v262 = vpack.c.bf16 %v174, %v170
    %v263 = vpack.c.bf16 %v245, %v241
    %v264 = vpack.c.bf16 %v247, %v243
    %v281 = vunpack.c.l.b16 %v249
    %v282 = vunpack.c.l.b16 %v250
    %v283 = vunpack.c.l.b16 %v251
    %v284 = vunpack.c.l.b16 %v252
    %v285 = vunpack.c.h.b16 %v249
    %v286 = vunpack.c.h.b16 %v250
    %v287 = vunpack.c.h.b16 %v251
    %v288 = vunpack.c.h.b16 %v252
    %v289 = vunpack.c.l.b16 %v253
    %v290 = vunpack.c.l.b16 %v254
    %v291 = vunpack.c.l.b16 %v255
    %v292 = vunpack.c.l.b16 %v256
    %v293 = vunpack.c.h.b16 %v253
    %v294 = vunpack.c.h.b16 %v254
    %v295 = vunpack.c.h.b16 %v255
    %v296 = vunpack.c.h.b16 %v256
    %v297 = vunpack.c.l.b16 %v257
    %v298 = vunpack.c.l.b16 %v258
    %v299 = vunpack.c.l.b16 %v259
    %v300 = vunpack.c.l.b16 %v260
    %v301 = vunpack.c.h.b16 %v257
    %v302 = vunpack.c.h.b16 %v258
    %v303 = vunpack.c.h.b16 %v259
    %v304 = vunpack.c.h.b16 %v260
    %v305 = vunpack.c.l.b16 %v261
    %v306 = vunpack.c.l.b16 %v262
    %v307 = vunpack.c.l.b16 %v263
    %v308 = vunpack.c.l.b16 %v264
    %v309 = vunpack.c.h.b16 %v261
    %v310 = vunpack.c.h.b16 %v262
    %v311 = vunpack.c.h.b16 %v263
    %v312 = vunpack.c.h.b16 %v264
    %v313 = vpack.c.b16 %v282, %v281
    %v314 = vpack.c.b16 %v284, %v283
    %v315 = vpack.c.b16 %v286, %v285
    %v316 = vpack.c.b16 %v288, %v287
    %v317 = vpack.c.b16 %v290, %v289
    %v318 = vpack.c.b16 %v292, %v291
    %v319 = vpack.c.b16 %v294, %v293
    %v320 = vpack.c.b16 %v296, %v295
    %v321 = vpack.c.b16 %v298, %v297
    %v322 = vpack.c.b16 %v300, %v299
    %v323 = vpack.c.b16 %v302, %v301
    %v324 = vpack.c.b16 %v304, %v303
    %v325 = vpack.c.b16 %v306, %v305
    %v326 = vpack.c.b16 %v308, %v307
    %v327 = vpack.c.b16 %v310, %v309
    %v328 = vpack.c.b16 %v312, %v311
    %345 = vst [vmem:[#allocation2] sm:$0xff] %v313
    %346 = vst [vmem:[#allocation2 + $0x8] sm:$0xff] %v314
    %347 = vst [vmem:[#allocation2 + $0x10] sm:$0xff] %v315
    %348 = vst [vmem:[#allocation2 + $0x18] sm:$0xff] %v316
    %349 = vst [vmem:[#allocation2 + $0x20] sm:$0xff] %v317
    %350 = vst [vmem:[#allocation2 + $0x28] sm:$0xff] %v318
    %351 = vst [vmem:[#allocation2 + $0x30] sm:$0xff] %v319
    %352 = vst [vmem:[#allocation2 + $0x38] sm:$0xff] %v320
    %353 = vst [vmem:[#allocation2 + $0x40] sm:$0xff] %v321
    %354 = vst [vmem:[#allocation2 + $0x48] sm:$0xff] %v322
    %355 = vst [vmem:[#allocation2 + $0x50] sm:$0xff] %v323
    %356 = vst [vmem:[#allocation2 + $0x58] sm:$0xff] %v324
    %357 = vst [vmem:[#allocation2 + $0x60] sm:$0xff] %v325
    %358 = vst [vmem:[#allocation2 + $0x68] sm:$0xff] %v326
    %359 = vst [vmem:[#allocation2 + $0x70] sm:$0xff] %v327
    %360 = vst [vmem:[#allocation2 + $0x78] sm:$0xff] %v328
    // Predicated region
    $region14: #{tpu_custom_call.1} parent=1 // pred_check
      _
    $region15: #{tpu_custom_call.1} parent=1 // pred_check_branch
      %362 = sbr.rel (0) target = $region17
    $region16: #{tpu_custom_call.1} parent=1 // pred_region
      %s364 = ssub.s32 2048, 2048
      %365 = vsyncadd [#allocation3], %s364
      %s366 = sshll.u32 [#allocation2], 4
      %s367 = int_to_ptr.vmem [resolvable:$true] %s366
      %372 = dma.vmem_to_hbm [thread:$0]  %s367, 2048, %s3, [#allocation3], 256, 256, 16
    $region17: #{tpu_custom_call.1} parent=1 // pred_fallthru
      _
    // Predicated region
    $region18: #{tpu_custom_call.1} parent=1 // pred_check
      _
    $region19: #{tpu_custom_call.1} parent=1 // pred_check_branch
      %374 = sbr.rel (0) target = $region21
    $region20: #{tpu_custom_call.1} parent=1 // pred_region
      %375 = dma.done [#allocation3], 2048
    $region21: #{tpu_custom_call.1} parent=1 // pred_fallthru
      _
    %376 = vsyncpa [#allocation3], 1

</llo_original>
